<compile_context>
chip_gen: v7x
topology: tpu7x:2x2x1
jax: 0.10.0
libtpu: 0.0.40
codegen_flags: <defaults>
</compile_context>

<pallas_src>
import functools
import math

import numpy as np
import jax
import jax.numpy as jnp
from jax import lax
from jax.experimental import pallas as pl
from jax.experimental.pallas import tpu as pltpu

BN_EPS = 1e-5


def _gelu_exact(x):
    # matches torch.nn.GELU() default (erf formulation)
    return 0.5 * x * (1.0 + lax.erf(x * (1.0 / math.sqrt(2.0))))


# ---------------------------------------------------------------------------
# Fused whole-ResBlock kernel: one batch image per grid step, all activations
# resident in VMEM/vregs, one MXU matmul per conv.
# ---------------------------------------------------------------------------
def resblock_kernel(x_ref, w_ref, b_ref, o_ref, *, H, Wl, K, block_size):
    # x_ref : (1, H, Wl)        input image, Wl = W*C  (lane-dense, Wl = 128 here)
    # w_ref : (L, K*Wl, Wl)     packed conv weights with BN scale folded in, L = 2*block_size
    # b_ref : (L, 1, Wl)        folded BN bias, tiled over W on the lane axis
    # o_ref : (1, H, Wl)
    p = K // 2
    zrows = jnp.zeros((p, Wl), jnp.float32)

    def conv_bn(cur, li):
        # 'same' KxK conv + BN as a single lane-dense matmul:
        #  - zero-pad H with p rows top/bottom (value concat along sublanes)
        #  - stack the K row-shifted views on the lane axis (128-aligned concat)
        #  - multiply by the block-banded matrix that encodes the W-direction
        #    taps, the channel mixing and the BN scale; add folded BN bias.
        xpad = jnp.concatenate([zrows, cur, zrows], axis=0)                    # (H+2p, Wl)
        xcat = jnp.concatenate([xpad[dy:dy + H] for dy in range(K)], axis=1)   # (H, K*Wl)
        y = jnp.dot(xcat, w_ref[li], preferred_element_type=jnp.float32)       # (H, Wl)
        return y + b_ref[li]

    x = x_ref[0].astype(jnp.float32)
    res = x                                        # proj = Identity (stride = 1)
    for bi in range(block_size):
        t = _gelu_exact(conv_bn(x, 2 * bi))        # conv1 -> BN1 -> GELU (dropout = id in eval)
        t = conv_bn(t, 2 * bi + 1)                 # conv2 -> BN2         (dropout = id in eval)
        x = _gelu_exact(res + t)
        res = x
    o_ref[0] = x.astype(o_ref.dtype)


# ---------------------------------------------------------------------------
# Wrapper: layout plumbing + weight packing + pallas_call
# ---------------------------------------------------------------------------
def _pack_conv_bn(w_hwio, scale, W):
    """Pack a KxK conv weight (HWIO) + per-output-channel BN scale into the
    block-banded matrix used by the kernel, shape (K*W*Cin, W*Cout):
      M[dy*W*Cin + w_in*Cin + ci, w_out*Cout + co] = w[dy, w_in-w_out+p, ci, co] * scale[co]
    (zero where the dx tap falls outside the kernel support)."""
    Kh, Kw, Cin, Cout = w_hwio.shape
    p = Kw // 2
    w_in = np.arange(W)[:, None]
    w_out = np.arange(W)[None, :]
    dx = w_in - w_out + p                                    # (W, W)
    valid = ((dx >= 0) & (dx < Kw)).astype(np.float32)
    dx_c = np.clip(dx, 0, Kw - 1)
    A = w_hwio[:, dx_c, :, :]                                # (K, Win, Wout, Cin, Cout)
    A = A * jnp.asarray(valid)[None, :, :, None, None]
    A = A * scale[None, None, None, None, :]                 # fold BN scale into conv weights
    A = jnp.transpose(A, (0, 1, 3, 2, 4))                    # (K, Win, Cin, Wout, Cout)
    return A.reshape(Kh * W * Cin, W * Cout)


def resblock_forward_pallas(x_nchw, params):
    N, C, H, W = x_nchw.shape
    K = params[0]["w1_hwio"].shape[0]
    Wl = W * C
    L = 2 * len(params)

    # NCHW -> NHWC -> (N, H, W*C): one transpose+reshape, lane-dense presentation.
    x2d = jnp.transpose(x_nchw, (0, 2, 3, 1)).reshape(N, H, Wl)

    w_list, b_list = [], []
    for p in params:
        for j in ("1", "2"):
            w_list.append(_pack_conv_bn(p["w" + j + "_hwio"], p["s" + j], W))
            b_list.append(jnp.tile(p["b" + j], W).reshape(1, Wl))
    w_all = jnp.stack(w_list)            # (L, K*Wl, Wl)
    b_all = jnp.stack(b_list)            # (L, 1, Wl)

    kern = functools.partial(resblock_kernel, H=H, Wl=Wl, K=K,
                             block_size=len(params))
    out2d = pl.pallas_call(
        kern,
        out_shape=jax.ShapeDtypeStruct((N, H, Wl), x_nchw.dtype),
        grid_spec=pltpu.PrefetchScalarGridSpec(
            num_scalar_prefetch=0,
            grid=(N,),
            in_specs=[
                pl.BlockSpec((1, H, Wl), lambda n: (n, 0, 0)),
                pl.BlockSpec((L, K * Wl, Wl), lambda n: (0, 0, 0)),   # resident weights
                pl.BlockSpec((L, 1, Wl), lambda n: (0, 0, 0)),        # resident bias
            ],
            out_specs=pl.BlockSpec((1, H, Wl), lambda n: (n, 0, 0)),
        ),
        compiler_params=pltpu.CompilerParams(
            dimension_semantics=("parallel",),
            vmem_limit_bytes=32 * 1024 * 1024,
        ),
    )(x2d, w_all, b_all)

    return jnp.transpose(out2d.reshape(N, H, W, C), (0, 3, 1, 2))    # back to NCHW


# ---------------------------------------------------------------------------
# Parameter construction (deterministic) — BN folded to per-channel scale/bias
# ---------------------------------------------------------------------------
def init_resblock_params(key, block_size, kernel_size, in_ch, out_ch, stride=1):
    assert stride == 1, "stride>1 projection path not implemented"
    assert in_ch == out_ch, "stride=1 requires in_ch == out_ch (residual add)"
    params = []
    k = key
    for _ in range(block_size):
        blk = {}
        for name in ("1", "2"):
            k, kw, kg, kb, km, kv = jax.random.split(k, 6)
            fan_in = out_ch * kernel_size * kernel_size
            w_oihw = jax.random.normal(
                kw, (out_ch, out_ch, kernel_size, kernel_size),
                dtype=jnp.float32) * (1.0 / math.sqrt(fan_in))
            gamma = 1.0 + 0.1 * jax.random.normal(kg, (out_ch,), jnp.float32)
            beta = 0.1 * jax.random.normal(kb, (out_ch,), jnp.float32)
            mean = 0.1 * jax.random.normal(km, (out_ch,), jnp.float32)
            var = jnp.abs(1.0 + 0.1 * jax.random.normal(kv, (out_ch,), jnp.float32))
            blk["w" + name + "_oihw"] = w_oihw
            blk["w" + name + "_hwio"] = jnp.transpose(w_oihw, (2, 3, 1, 0))
            scale = gamma / jnp.sqrt(var + BN_EPS)
            blk["s" + name] = scale
            blk["b" + name] = beta - mean * scale
            blk["bn" + name] = (gamma, beta, mean, var)
        params.append(blk)
    return params


# ---------------------------------------------------------------------------
# Pure-JAX reference (NCHW) for correctness checking
# ---------------------------------------------------------------------------
def resblock_forward_ref(x_nchw, params):
    def conv(x, w):
        return lax.conv_general_dilated(
            x, w, window_strides=(1, 1), padding="SAME",
            dimension_numbers=("NCHW", "OIHW", "NCHW"))

    def bn(x, stats):
        gamma, beta, mean, var = stats
        s = gamma / jnp.sqrt(var + BN_EPS)
        b = beta - mean * s
        return x * s[None, :, None, None] + b[None, :, None, None]

    def gelu(x):
        return 0.5 * x * (1.0 + lax.erf(x / jnp.sqrt(2.0)))

    x = x_nchw
    res = x
    for p in params:
        t = gelu(bn(conv(x, p["w1_oihw"]), p["bn1"]))
        t = bn(conv(t, p["w2_oihw"]), p["bn2"])
        x = gelu(res + t)
        res = x
    return x


if __name__ == "__main__":
    block_size, kernel_size = 2, 3
    in_ch = out_ch = 8
    N, H, W = 2, 16, 16          # W * C = 128 -> fully lane-dense kernel layout

    key = jax.random.PRNGKey(0)
    kx, kp = jax.random.split(key)
    x = jax.random.normal(kx, (N, in_ch, H, W), dtype=jnp.float32)
    params = init_resblock_params(kp, block_size, kernel_size, in_ch, out_ch)

    out = jax.block_until_ready(resblock_forward_pallas(x, params))
    ref = jax.block_until_ready(resblock_forward_ref(x, params))

    assert out.shape == ref.shape == (N, out_ch, H, W)
    assert jnp.allclose(out, ref, atol=2e-3, rtol=2e-3), (
        float(jnp.max(jnp.abs(out - ref))))

    print("KERNEL_OK")
</pallas_src>

<mosaic_0001>
module attributes {stable_mosaic.version = 11 : i64} {
  func.func @resblock_kernel(%arg0: i32, %arg1: memref<1x16x128xf32, #tpu.memory_space<vmem>>, %arg2: memref<4x384x128xf32, #tpu.memory_space<vmem>>, %arg3: memref<4x1x128xf32, #tpu.memory_space<vmem>>, %arg4: memref<1x16x128xf32, #tpu.memory_space<vmem>>) attributes {dimension_semantics = [#tpu.dimension_semantics<parallel>], iteration_bounds = array<i64: 2>, scalar_prefetch = 0 : i64, scratch_operands = 0 : i64, tpu.core_type = #tpu.core_type<tc>, window_params = [{transform_indices = @transform_0, window_bounds = array<i64: 1, 16, 128>}, {pipeline_mode = #tpu.pipeline_mode<synchronous>, transform_indices = @transform_1, window_bounds = array<i64: 4, 384, 128>}, {pipeline_mode = #tpu.pipeline_mode<synchronous>, transform_indices = @transform_2, window_bounds = array<i64: 4, 1, 128>}, {transform_indices = @transform_3, window_bounds = array<i64: 1, 16, 128>}]} {
    %cst = arith.constant 0.000000e+00 : f32
    %0 = vector.broadcast %cst : f32 to vector<1x128xf32>
    %c0 = arith.constant 0 : index
    %c0_0 = arith.constant 0 : index
    %c0_1 = arith.constant 0 : index
    %1 = vector.load %arg1[%c0, %c0_0, %c0_1] : memref<1x16x128xf32, #tpu.memory_space<vmem>>, vector<1x16x128xf32>
    %2 = vector.shape_cast %1 : vector<1x16x128xf32> to vector<16x128xf32>
    %3 = tpu.concatenate %0, %2, %0 in 0 : vector<1x128xf32>, vector<16x128xf32>, vector<1x128xf32> -> vector<18x128xf32>
    %4 = vector.extract_strided_slice %3 {offsets = [0, 0], sizes = [16, 128], strides = [1, 1]} : vector<18x128xf32> to vector<16x128xf32>
    %5 = vector.extract_strided_slice %3 {offsets = [1, 0], sizes = [16, 128], strides = [1, 1]} : vector<18x128xf32> to vector<16x128xf32>
    %6 = vector.extract_strided_slice %3 {offsets = [2, 0], sizes = [16, 128], strides = [1, 1]} : vector<18x128xf32> to vector<16x128xf32>
    %7 = tpu.concatenate %4, %5, %6 in 1 : vector<16x128xf32>, vector<16x128xf32>, vector<16x128xf32> -> vector<16x384xf32>
    %c0_2 = arith.constant 0 : index
    %c0_3 = arith.constant 0 : index
    %c0_4 = arith.constant 0 : index
    %8 = vector.load %arg2[%c0_2, %c0_3, %c0_4] : memref<4x384x128xf32, #tpu.memory_space<vmem>>, vector<1x384x128xf32>
    %9 = vector.shape_cast %8 : vector<1x384x128xf32> to vector<384x128xf32>
    %cst_5 = arith.constant dense<0.000000e+00> : vector<16x128xf32>
    %10 = tpu.matmul %7, %9, %cst_5 {dimension_numbers = #tpu.dot_dimension_numbers<[1], [0], [0], [1], [0, 0, 1, 1], [], []>} : vector<16x384xf32>, vector<384x128xf32>, vector<16x128xf32> -> vector<16x128xf32>
    %c0_6 = arith.constant 0 : index
    %c0_7 = arith.constant 0 : index
    %c0_8 = arith.constant 0 : index
    %11 = vector.load %arg3[%c0_6, %c0_7, %c0_8] : memref<4x1x128xf32, #tpu.memory_space<vmem>>, vector<1x1x128xf32>
    %12 = vector.shape_cast %11 : vector<1x1x128xf32> to vector<1x128xf32>
    %13 = vector.broadcast %12 : vector<1x128xf32> to vector<16x128xf32>
    %14 = arith.addf %10, %13 : vector<16x128xf32>
    %cst_9 = arith.constant 5.000000e-01 : f32
    %15 = vector.broadcast %cst_9 : f32 to vector<16x128xf32>
    %16 = arith.mulf %15, %14 : vector<16x128xf32>
    %cst_10 = arith.constant 0.707106769 : f32
    %17 = vector.broadcast %cst_10 : f32 to vector<16x128xf32>
    %18 = arith.mulf %14, %17 : vector<16x128xf32>
    %19 = math.erf %18 : vector<16x128xf32>
    %cst_11 = arith.constant 1.000000e+00 : f32
    %20 = vector.broadcast %cst_11 : f32 to vector<16x128xf32>
    %21 = arith.addf %20, %19 : vector<16x128xf32>
    %22 = arith.mulf %16, %21 : vector<16x128xf32>
    %23 = tpu.concatenate %0, %22, %0 in 0 : vector<1x128xf32>, vector<16x128xf32>, vector<1x128xf32> -> vector<18x128xf32>
    %24 = vector.extract_strided_slice %23 {offsets = [0, 0], sizes = [16, 128], strides = [1, 1]} : vector<18x128xf32> to vector<16x128xf32>
    %25 = vector.extract_strided_slice %23 {offsets = [1, 0], sizes = [16, 128], strides = [1, 1]} : vector<18x128xf32> to vector<16x128xf32>
    %26 = vector.extract_strided_slice %23 {offsets = [2, 0], sizes = [16, 128], strides = [1, 1]} : vector<18x128xf32> to vector<16x128xf32>
    %27 = tpu.concatenate %24, %25, %26 in 1 : vector<16x128xf32>, vector<16x128xf32>, vector<16x128xf32> -> vector<16x384xf32>
    %c1 = arith.constant 1 : index
    %c0_12 = arith.constant 0 : index
    %c0_13 = arith.constant 0 : index
    %28 = vector.load %arg2[%c1, %c0_12, %c0_13] : memref<4x384x128xf32, #tpu.memory_space<vmem>>, vector<1x384x128xf32>
    %29 = vector.shape_cast %28 : vector<1x384x128xf32> to vector<384x128xf32>
    %cst_14 = arith.constant dense<0.000000e+00> : vector<16x128xf32>
    %30 = tpu.matmul %27, %29, %cst_14 {dimension_numbers = #tpu.dot_dimension_numbers<[1], [0], [0], [1], [0, 0, 1, 1], [], []>} : vector<16x384xf32>, vector<384x128xf32>, vector<16x128xf32> -> vector<16x128xf32>
    %c1_15 = arith.constant 1 : index
    %c0_16 = arith.constant 0 : index
    %c0_17 = arith.constant 0 : index
    %31 = vector.load %arg3[%c1_15, %c0_16, %c0_17] : memref<4x1x128xf32, #tpu.memory_space<vmem>>, vector<1x1x128xf32>
    %32 = vector.shape_cast %31 : vector<1x1x128xf32> to vector<1x128xf32>
    %33 = vector.broadcast %32 : vector<1x128xf32> to vector<16x128xf32>
    %34 = arith.addf %30, %33 : vector<16x128xf32>
    %35 = arith.addf %2, %34 : vector<16x128xf32>
    %cst_18 = arith.constant 5.000000e-01 : f32
    %36 = vector.broadcast %cst_18 : f32 to vector<16x128xf32>
    %37 = arith.mulf %36, %35 : vector<16x128xf32>
    %cst_19 = arith.constant 0.707106769 : f32
    %38 = vector.broadcast %cst_19 : f32 to vector<16x128xf32>
    %39 = arith.mulf %35, %38 : vector<16x128xf32>
    %40 = math.erf %39 : vector<16x128xf32>
    %cst_20 = arith.constant 1.000000e+00 : f32
    %41 = vector.broadcast %cst_20 : f32 to vector<16x128xf32>
    %42 = arith.addf %41, %40 : vector<16x128xf32>
    %43 = arith.mulf %37, %42 : vector<16x128xf32>
    %44 = tpu.concatenate %0, %43, %0 in 0 : vector<1x128xf32>, vector<16x128xf32>, vector<1x128xf32> -> vector<18x128xf32>
    %45 = vector.extract_strided_slice %44 {offsets = [0, 0], sizes = [16, 128], strides = [1, 1]} : vector<18x128xf32> to vector<16x128xf32>
    %46 = vector.extract_strided_slice %44 {offsets = [1, 0], sizes = [16, 128], strides = [1, 1]} : vector<18x128xf32> to vector<16x128xf32>
    %47 = vector.extract_strided_slice %44 {offsets = [2, 0], sizes = [16, 128], strides = [1, 1]} : vector<18x128xf32> to vector<16x128xf32>
    %48 = tpu.concatenate %45, %46, %47 in 1 : vector<16x128xf32>, vector<16x128xf32>, vector<16x128xf32> -> vector<16x384xf32>
    %c2 = arith.constant 2 : index
    %c0_21 = arith.constant 0 : index
    %c0_22 = arith.constant 0 : index
    %49 = vector.load %arg2[%c2, %c0_21, %c0_22] : memref<4x384x128xf32, #tpu.memory_space<vmem>>, vector<1x384x128xf32>
    %50 = vector.shape_cast %49 : vector<1x384x128xf32> to vector<384x128xf32>
    %cst_23 = arith.constant dense<0.000000e+00> : vector<16x128xf32>
    %51 = tpu.matmul %48, %50, %cst_23 {dimension_numbers = #tpu.dot_dimension_numbers<[1], [0], [0], [1], [0, 0, 1, 1], [], []>} : vector<16x384xf32>, vector<384x128xf32>, vector<16x128xf32> -> vector<16x128xf32>
    %c2_24 = arith.constant 2 : index
    %c0_25 = arith.constant 0 : index
    %c0_26 = arith.constant 0 : index
    %52 = vector.load %arg3[%c2_24, %c0_25, %c0_26] : memref<4x1x128xf32, #tpu.memory_space<vmem>>, vector<1x1x128xf32>
    %53 = vector.shape_cast %52 : vector<1x1x128xf32> to vector<1x128xf32>
    %54 = vector.broadcast %53 : vector<1x128xf32> to vector<16x128xf32>
    %55 = arith.addf %51, %54 : vector<16x128xf32>
    %cst_27 = arith.constant 5.000000e-01 : f32
    %56 = vector.broadcast %cst_27 : f32 to vector<16x128xf32>
    %57 = arith.mulf %56, %55 : vector<16x128xf32>
    %cst_28 = arith.constant 0.707106769 : f32
    %58 = vector.broadcast %cst_28 : f32 to vector<16x128xf32>
    %59 = arith.mulf %55, %58 : vector<16x128xf32>
    %60 = math.erf %59 : vector<16x128xf32>
    %cst_29 = arith.constant 1.000000e+00 : f32
    %61 = vector.broadcast %cst_29 : f32 to vector<16x128xf32>
    %62 = arith.addf %61, %60 : vector<16x128xf32>
    %63 = arith.mulf %57, %62 : vector<16x128xf32>
    %64 = tpu.concatenate %0, %63, %0 in 0 : vector<1x128xf32>, vector<16x128xf32>, vector<1x128xf32> -> vector<18x128xf32>
    %65 = vector.extract_strided_slice %64 {offsets = [0, 0], sizes = [16, 128], strides = [1, 1]} : vector<18x128xf32> to vector<16x128xf32>
    %66 = vector.extract_strided_slice %64 {offsets = [1, 0], sizes = [16, 128], strides = [1, 1]} : vector<18x128xf32> to vector<16x128xf32>
    %67 = vector.extract_strided_slice %64 {offsets = [2, 0], sizes = [16, 128], strides = [1, 1]} : vector<18x128xf32> to vector<16x128xf32>
    %68 = tpu.concatenate %65, %66, %67 in 1 : vector<16x128xf32>, vector<16x128xf32>, vector<16x128xf32> -> vector<16x384xf32>
    %c3 = arith.constant 3 : index
    %c0_30 = arith.constant 0 : index
    %c0_31 = arith.constant 0 : index
    %69 = vector.load %arg2[%c3, %c0_30, %c0_31] : memref<4x384x128xf32, #tpu.memory_space<vmem>>, vector<1x384x128xf32>
    %70 = vector.shape_cast %69 : vector<1x384x128xf32> to vector<384x128xf32>
    %cst_32 = arith.constant dense<0.000000e+00> : vector<16x128xf32>
    %71 = tpu.matmul %68, %70, %cst_32 {dimension_numbers = #tpu.dot_dimension_numbers<[1], [0], [0], [1], [0, 0, 1, 1], [], []>} : vector<16x384xf32>, vector<384x128xf32>, vector<16x128xf32> -> vector<16x128xf32>
    %c3_33 = arith.constant 3 : index
    %c0_34 = arith.constant 0 : index
    %c0_35 = arith.constant 0 : index
    %72 = vector.load %arg3[%c3_33, %c0_34, %c0_35] : memref<4x1x128xf32, #tpu.memory_space<vmem>>, vector<1x1x128xf32>
    %73 = vector.shape_cast %72 : vector<1x1x128xf32> to vector<1x128xf32>
    %74 = vector.broadcast %73 : vector<1x128xf32> to vector<16x128xf32>
    %75 = arith.addf %71, %74 : vector<16x128xf32>
    %76 = arith.addf %43, %75 : vector<16x128xf32>
    %cst_36 = arith.constant 5.000000e-01 : f32
    %77 = vector.broadcast %cst_36 : f32 to vector<16x128xf32>
    %78 = arith.mulf %77, %76 : vector<16x128xf32>
    %cst_37 = arith.constant 0.707106769 : f32
    %79 = vector.broadcast %cst_37 : f32 to vector<16x128xf32>
    %80 = arith.mulf %76, %79 : vector<16x128xf32>
    %81 = math.erf %80 : vector<16x128xf32>
    %cst_38 = arith.constant 1.000000e+00 : f32
    %82 = vector.broadcast %cst_38 : f32 to vector<16x128xf32>
    %83 = arith.addf %82, %81 : vector<16x128xf32>
    %84 = arith.mulf %78, %83 : vector<16x128xf32>
    %c0_39 = arith.constant 0 : index
    %c0_40 = arith.constant 0 : index
    %c0_41 = arith.constant 0 : index
    %85 = vector.load %arg4[%c0_39, %c0_40, %c0_41] : memref<1x16x128xf32, #tpu.memory_space<vmem>>, vector<1x16x128xf32>
    %86 = vector.shape_cast %85 : vector<1x16x128xf32> to vector<16x128xf32>
    %87 = vector.shape_cast %84 : vector<16x128xf32> to vector<1x16x128xf32>
    tpu.vector_store %arg4[%c0_39, %c0_40, %c0_41], %87 {strides = array<i32>} : memref<1x16x128xf32, #tpu.memory_space<vmem>>, vector<1x16x128xf32>,
    return
  }
  func.func @transform_0(%arg0: i32) -> (i32, i32, i32) {
    %c0_i32 = arith.constant 0 : i32
    %c0_i32_0 = arith.constant 0 : i32
    %c0_i32_1 = arith.constant 0 : i32
    return %arg0, %c0_i32, %c0_i32_0 : i32, i32, i32
  }
  func.func @transform_1(%arg0: i32) -> (i32, i32, i32) {
    %c0_i32 = arith.constant 0 : i32
    %c0_i32_0 = arith.constant 0 : i32
    %c0_i32_1 = arith.constant 0 : i32
    %c0_i32_2 = arith.constant 0 : i32
    return %c0_i32, %c0_i32_0, %c0_i32_1 : i32, i32, i32
  }
  func.func @transform_2(%arg0: i32) -> (i32, i32, i32) {
    %c0_i32 = arith.constant 0 : i32
    %c0_i32_0 = arith.constant 0 : i32
    %c0_i32_1 = arith.constant 0 : i32
    %c0_i32_2 = arith.constant 0 : i32
    return %c0_i32, %c0_i32_0, %c0_i32_1 : i32, i32, i32
  }
  func.func @transform_3(%arg0: i32) -> (i32, i32, i32) {
    %c0_i32 = arith.constant 0 : i32
    %c0_i32_0 = arith.constant 0 : i32
    %c0_i32_1 = arith.constant 0 : i32
    return %arg0, %c0_i32, %c0_i32_0 : i32, i32, i32
  }
}

</mosaic_0001>

<llo_original>
// kernel: tpu_custom_call.1
$region0: #{tpu_custom_call.1}
  #allocation0 [shape = 'u32[]', space=smem, size = 0x4, offset = 0x4, fixed_abs, tag = 'smem constant byte address 0x4 - core index']
  #allocation1 [shape = 'u32[144,128]{1,0:T(1,128)}', space=vmem, size = 0x12000, scoped, tag = 'internal scratch']
  %s0 = inlined_call_operand.hbm [shape: f32[2,16,128], index: 0, kind: input, shape index: {}]
  %s1 = inlined_call_operand.hbm [shape: f32[4,384,128], index: 1, kind: input, shape index: {}]
  %s2 = inlined_call_operand.vmem [shape: f32[4,1,128], index: 2, kind: input, shape index: {}]
  %s3 = inlined_call_operand.hbm [shape: f32[2,16,128], index: 3, kind: output, shape index: {}]
  %s4 = sld [smem:[#allocation0]]
  $region53: #{tpu_custom_call.1} parent=0
    _
  %s6 = ssub.s32 1, %s4
  %s7 = scalar_select 0, %s6, %s4
  $region1: #{tpu_custom_call.1} parent=0
    #allocation2 [shape = 'u8[16384]{0}', space=vmem, size = 0x4000, scoped, tag = 'input window, operand 0']
    #allocation3 [shape = 's32[2]{0}', space=sflag, size = 0x8, scoped, tag = 'scoped memory for tpu_custom_call.1']
    #allocation4 [shape = 's32[2]{0}', space=sflag, size = 0x8, scoped, tag = 'scoped memory for tpu_custom_call.1']
    #allocation5 [shape = 'u8[786432]{0}', space=vmem, size = 0xc0000, scoped, tag = 'input window, operand 1, single buffered']
    #allocation6 [shape = 's32[1]{0}', space=sflag, size = 0x4, scoped, tag = 'scoped memory for tpu_custom_call.1']
    #allocation7 [shape = 'u8[16384]{0}', space=vmem, size = 0x4000, scoped, tag = 'output window, operand 0']
    %8 = vsyncpa [#allocation3], 0
    %s9 = scalar_lea.sflag [#allocation3], 1
    %10 = vsyncpa %s9, 0
    %11 = vsyncpa [#allocation6], 0
    %12 = vsyncpa [#allocation4], 0
    %s13 = scalar_lea.sflag [#allocation4], 1
    %14 = vsyncpa %s13, 0
    loop: start=0, step=1, limit=4
    $region2: #{tpu_custom_call.1} parent=1 // loop_pre_header
      _
    $region3: #{tpu_custom_call.1} parent=1 // loop_header
      %s16 = sphi 0, %s20
      %p17 = scmp.ge.s32.totalorder %s16, 4
      %s26 = sphi 0, %s28
      %s29 = sphi 0, %s26
      %s30 = sphi 0, %s29
      %s46 = sphi 0, %s30
      %s50 = sphi 0, %s50
      %s52 = sphi 0, %s50
      %s53 = sphi 0, %s52
      %s67 = sphi 0, %s53
      %s71 = sphi 0, %s71
      %s73 = sphi 0, %s71
      %s74 = sphi 0, %s73
      %s88 = sphi 0, %s74
      %s94 = sphi 0, %s96
      %s97 = sphi 0, %s94
      %s98 = sphi 0, %s97
      %s114 = sphi 0, %s98
    $region4: #{tpu_custom_call.1} parent=1 // loop_header_branch
      %19 = sbr.rel (%p17) target = $region8
    $region5: #{tpu_custom_call.1} parent=1 // loop_body
      %s21 = ssub.s32 %s16, 1
      %s22 = ssub.s32 %s16, 2
      %s23 = sadd.s32 %s16, 1
      %s24 = ssub.s32 %s16, %s23
      %p25 = scmp.eq.s32.totalorder %s24, 0
      %s27 = sadd.s32 %s26, 1
      %s28 = scalar_select %p25, %s26, %s27
      %p31 = pneg %p25
      %p32 = scmp.eq.s32.totalorder %s16, 1
      %p33 = por %p31, %p32
      %p34 = scmp.ne.s32.totalorder %s26, %s29
      %p35 = scmp.eq.s32.totalorder %s16, 0
      %p36 = por %p34, %p35
      %p37 = scmp.ne.s32.totalorder %s26, %s29
      %p38 = scmp.eq.s32.totalorder %s21, 1
      %p39 = por %p37, %p38
      %p40 = scmp.ne.s32.totalorder %s29, %s30
      %p41 = scmp.eq.s32.totalorder %s21, 0
      %p42 = por %p40, %p41
      %p43 = scmp.ne.s32.totalorder %s29, %s30
      %p44 = scmp.eq.s32.totalorder %s22, 1
      %p45 = por %p43, %p44
      %p47 = scmp.ne.s32.totalorder %s30, %s46
      %p48 = scmp.eq.s32.totalorder %s22, 0
      %p49 = por %p47, %p48
      %s51 = sadd.s32 %s50, 1
      %p54 = scmp.eq.s32.totalorder %s16, 1
      %p55 = scmp.ne.s32.totalorder %s50, %s52
      %p56 = scmp.eq.s32.totalorder %s16, 0
      %p57 = por %p55, %p56
      %p58 = scmp.ne.s32.totalorder %s50, %s52
      %p59 = scmp.eq.s32.totalorder %s21, 1
      %p60 = por %p58, %p59
      %p61 = scmp.ne.s32.totalorder %s52, %s53
      %p62 = scmp.eq.s32.totalorder %s21, 0
      %p63 = por %p61, %p62
      %p64 = scmp.ne.s32.totalorder %s52, %s53
      %p65 = scmp.eq.s32.totalorder %s22, 1
      %p66 = por %p64, %p65
      %p68 = scmp.ne.s32.totalorder %s53, %s67
      %p69 = scmp.eq.s32.totalorder %s22, 0
      %p70 = por %p68, %p69
      %s72 = sadd.s32 %s71, 1
      %p75 = scmp.eq.s32.totalorder %s16, 1
      %p76 = scmp.ne.s32.totalorder %s71, %s73
      %p77 = scmp.eq.s32.totalorder %s16, 0
      %p78 = por %p76, %p77
      %p79 = scmp.ne.s32.totalorder %s71, %s73
      %p80 = scmp.eq.s32.totalorder %s21, 1
      %p81 = por %p79, %p80
      %p82 = scmp.ne.s32.totalorder %s73, %s74
      %p83 = scmp.eq.s32.totalorder %s21, 0
      %p84 = por %p82, %p83
      %p85 = scmp.ne.s32.totalorder %s73, %s74
      %p86 = scmp.eq.s32.totalorder %s22, 1
      %p87 = por %p85, %p86
      %p89 = scmp.ne.s32.totalorder %s74, %s88
      %p90 = scmp.eq.s32.totalorder %s22, 0
      %p91 = por %p89, %p90
      %s92 = ssub.s32 %s16, %s23
      %p93 = scmp.eq.s32.totalorder %s92, 0
      %s95 = sadd.s32 %s94, 1
      %s96 = scalar_select %p93, %s94, %s95
      %p99 = pneg %p93
      %p100 = scmp.eq.s32.totalorder %s16, 1
      %p101 = por %p99, %p100
      %p102 = scmp.ne.s32.totalorder %s94, %s97
      %p103 = scmp.eq.s32.totalorder %s16, 0
      %p104 = por %p102, %p103
      %p105 = scmp.ne.s32.totalorder %s94, %s97
      %p106 = scmp.eq.s32.totalorder %s21, 1
      %p107 = por %p105, %p106
      %p108 = scmp.ne.s32.totalorder %s97, %s98
      %p109 = scmp.eq.s32.totalorder %s21, 0
      %p110 = por %p108, %p109
      %p111 = scmp.ne.s32.totalorder %s97, %s98
      %p112 = scmp.eq.s32.totalorder %s22, 1
      %p113 = por %p111, %p112
      %p115 = scmp.ne.s32.totalorder %s98, %s114
      %p116 = scmp.eq.s32.totalorder %s22, 0
      %p117 = por %p115, %p116
      %p118 = scmp.le.s32.totalorder 1, %s16
      %p119 = scmp.lt.s32.totalorder %s16, 3
      %p120 = pnand %p118, %p119
      %p121 = pneg %p120
      // Predicated region
      $region9: #{tpu_custom_call.1} parent=5 // pred_check
        _
      $region10: #{tpu_custom_call.1} parent=5 // pred_check_branch
        %123 = sbr.rel (%p120) target = $region12
      $region11: #{tpu_custom_call.1} parent=5 // pred_region
        %s124 = ssub.s32 %s16, 1
        // Predicated region
        $region13: #{tpu_custom_call.1} parent=11 // pred_check
          %p125 = pneg %p63
        $region14: #{tpu_custom_call.1} parent=11 // pred_check_branch
          %127 = sbr.rel (%p125) target = $region16
        $region15: #{tpu_custom_call.1} parent=11 // pred_region
          %s129 = ssub.s32 24576, 24576
          %130 = vsyncadd [#allocation6], %s129
          %s131 = sshll.u32 [#allocation5], 4
          %s132 = int_to_ptr.vmem [resolvable:$true] %s131
          %137 = dma.hbm_to_vmem [thread:$0]  %s1, 24576, %s132, [#allocation6], 128, 128, 8
        $region16: #{tpu_custom_call.1} parent=11 // pred_fallthru
          _
        // Predicated region
        $region17: #{tpu_custom_call.1} parent=11 // pred_check
          %p138 = pneg %p84
        $region18: #{tpu_custom_call.1} parent=11 // pred_check_branch
          %140 = sbr.rel (%p138) target = $region20
        $region19: #{tpu_custom_call.1} parent=11 // pred_region
          _
        $region20: #{tpu_custom_call.1} parent=11 // pred_fallthru
          _
      $region12: #{tpu_custom_call.1} parent=5 // pred_fallthru
        _
      %p141 = scmp.lt.s32.totalorder %s16, 2
      // Predicated region
      $region21: #{tpu_custom_call.1} parent=5 // pred_check
        %p142 = pneg %p141
      $region22: #{tpu_custom_call.1} parent=5 // pred_check_branch
        %144 = sbr.rel (%p142) target = $region24
      $region23: #{tpu_custom_call.1} parent=5 // pred_region
        // Predicated region
        $region25: #{tpu_custom_call.1} parent=23 // pred_check
          %p145 = pneg %p36
        $region26: #{tpu_custom_call.1} parent=23 // pred_check_branch
          %147 = sbr.rel (%p145) target = $region28
        $region27: #{tpu_custom_call.1} parent=23 // pred_region
          %s148 = sand.u32 %s26, 1
          %s149 = scalar_lea.sflag [#allocation3], %s148
          %s150 = sand.u32 %s26, 1
          %s151 = smul.addr %s150, 16
          %s152 = scalar_lea.vmem [#allocation2], %s151
          %s154 = ssub.s32 256, 256
          %155 = vsyncadd %s149, %s154
          %s156 = smul.addr %s16, 2
          %s157 = smul.addr %s156, 128
          %s158 = scalar_lea.hbm %s0, %s157
          %s159 = sshll.u32 %s152, 4
          %s160 = int_to_ptr.vmem [resolvable:$true] %s159
          %165 = dma.hbm_to_vmem [thread:$0]  %s158, 256, %s160, %s149, 128, 128, 8
        $region28: #{tpu_custom_call.1} parent=23 // pred_fallthru
          _
      $region24: #{tpu_custom_call.1} parent=5 // pred_fallthru
        _
      %p166 = scmp.le.s32.totalorder 1, %s16
      %p167 = scmp.lt.s32.totalorder %s16, 3
      %p168 = pnand %p166, %p167
      %p169 = pneg %p168
      // Predicated region
      $region29: #{tpu_custom_call.1} parent=5 // pred_check
        _
      $region30: #{tpu_custom_call.1} parent=5 // pred_check_branch
        %171 = sbr.rel (%p168) target = $region32
      $region31: #{tpu_custom_call.1} parent=5 // pred_region
        %s172 = ssub.s32 %s16, 1
        %s173 = sand.u32 %s29, 1
        %s174 = scalar_lea.sflag [#allocation3], %s173
        %s175 = sand.u32 %s29, 1
        %s176 = smul.addr %s175, 16
        %s177 = scalar_lea.vmem [#allocation2], %s176
        // Predicated region
        $region33: #{tpu_custom_call.1} parent=31 // pred_check
          %p178 = pneg %p42
        $region34: #{tpu_custom_call.1} parent=31 // pred_check_branch
          %180 = sbr.rel (%p178) target = $region36
        $region35: #{tpu_custom_call.1} parent=31 // pred_region
          %181 = dma.done %s174, 256
        $region36: #{tpu_custom_call.1} parent=31 // pred_fallthru
          _
        // Predicated region
        $region37: #{tpu_custom_call.1} parent=31 // pred_check
          %p182 = pneg %p63
        $region38: #{tpu_custom_call.1} parent=31 // pred_check_branch
          %184 = sbr.rel (%p182) target = $region40
        $region39: #{tpu_custom_call.1} parent=31 // pred_region
          %185 = dma.done [#allocation6], 24576
        $region40: #{tpu_custom_call.1} parent=31 // pred_fallthru
          _
        %s186 = sand.u32 %s29, 1
        %s187 = scalar_lea.sflag [#allocation3], %s186
        %s188 = sand.u32 %s29, 1
        %s189 = smul.addr %s188, 16
        %s190 = scalar_lea.vmem [#allocation2], %s189
        %p191 = pneg %p42
        %p192 = pneg %p39
        %p193 = pneg %p63
        %p194 = pneg %p60
        %p195 = pneg %p84
        %p196 = pneg %p81
        %p197 = pneg %p110
        %p198 = pneg %p107
        %s199 = sand.u32 %s97, 1
        %s200 = scalar_lea.sflag [#allocation4], %s199
        %s201 = sand.u32 %s97, 1
        %s202 = smul.addr %s201, 16
        %s203 = scalar_lea.vmem [#allocation7], %s202
        %v204 = vld [vmem:[%s177] sm:$0xff]
        %v205 = vld [vmem:[%s177 + $0x8] sm:$0xff]
        %vm208 = vcmask 1040384
        %v209 = vrot.slane %v204, 7
        %v210 = vrot.slane %v205, 7
        %v211 = vsel %vm208, %v209, %v210
        %v215 = vsel %vm208, 0.0, %v209
        %v216 = vsel %vm208, %v210, 0.0
        %vm219 = vcmask 1046528
        %v220 = vrot.slane %v215, 1
        %v221 = vrot.slane %v211, 1
        %v222 = vsel %vm219, %v220, %v221
        %v223 = vrot.slane %v216, 1
        %v224 = vsel %vm219, %v221, %v223
        %vm227 = vcmask 1045504
        %v228 = vrot.slane %v215, 2
        %v229 = vrot.slane %v211, 2
        %v230 = vsel %vm227, %v228, %v229
        %v231 = vrot.slane %v216, 2
        %v232 = vsel %vm227, %v229, %v231
        %v235 = vld [vmem:[#allocation5] sm:$0xff]
        %v236 = vld [vmem:[#allocation5 + $0x8] sm:$0xff]
        %v237 = vld [vmem:[#allocation5 + $0x10] sm:$0xff]
        %v238 = vld [vmem:[#allocation5 + $0x18] sm:$0xff]
        %v239 = vld [vmem:[#allocation5 + $0x20] sm:$0xff]
        %v240 = vld [vmem:[#allocation5 + $0x28] sm:$0xff]
        %v241 = vld [vmem:[#allocation5 + $0x30] sm:$0xff]
        %v242 = vld [vmem:[#allocation5 + $0x38] sm:$0xff]
        %v243 = vld [vmem:[#allocation5 + $0x40] sm:$0xff]
        %v244 = vld [vmem:[#allocation5 + $0x48] sm:$0xff]
        %v245 = vld [vmem:[#allocation5 + $0x50] sm:$0xff]
        %v246 = vld [vmem:[#allocation5 + $0x58] sm:$0xff]
        %v247 = vld [vmem:[#allocation5 + $0x60] sm:$0xff]
        %v248 = vld [vmem:[#allocation5 + $0x68] sm:$0xff]
        %v249 = vld [vmem:[#allocation5 + $0x70] sm:$0xff]
        %v250 = vld [vmem:[#allocation5 + $0x78] sm:$0xff]
        %v251 = vld [vmem:[#allocation5 + $0x80] sm:$0xff]
        %v252 = vld [vmem:[#allocation5 + $0x88] sm:$0xff]
        %v253 = vld [vmem:[#allocation5 + $0x90] sm:$0xff]
        %v254 = vld [vmem:[#allocation5 + $0x98] sm:$0xff]
        %v255 = vld [vmem:[#allocation5 + $0xa0] sm:$0xff]
        %v256 = vld [vmem:[#allocation5 + $0xa8] sm:$0xff]
        %v257 = vld [vmem:[#allocation5 + $0xb0] sm:$0xff]
        %v258 = vld [vmem:[#allocation5 + $0xb8] sm:$0xff]
        %v259 = vld [vmem:[#allocation5 + $0xc0] sm:$0xff]
        %v260 = vld [vmem:[#allocation5 + $0xc8] sm:$0xff]
        %v261 = vld [vmem:[#allocation5 + $0xd0] sm:$0xff]
        %v262 = vld [vmem:[#allocation5 + $0xd8] sm:$0xff]
        %v263 = vld [vmem:[#allocation5 + $0xe0] sm:$0xff]
        %v264 = vld [vmem:[#allocation5 + $0xe8] sm:$0xff]
        %v265 = vld [vmem:[#allocation5 + $0xf0] sm:$0xff]
        %v266 = vld [vmem:[#allocation5 + $0xf8] sm:$0xff]
        %v267 = vld [vmem:[#allocation5 + $0x100] sm:$0xff]
        %v268 = vld [vmem:[#allocation5 + $0x108] sm:$0xff]
        %v269 = vld [vmem:[#allocation5 + $0x110] sm:$0xff]
        %v270 = vld [vmem:[#allocation5 + $0x118] sm:$0xff]
        %v271 = vld [vmem:[#allocation5 + $0x120] sm:$0xff]
        %v272 = vld [vmem:[#allocation5 + $0x128] sm:$0xff]
        %v273 = vld [vmem:[#allocation5 + $0x130] sm:$0xff]
        %v274 = vld [vmem:[#allocation5 + $0x138] sm:$0xff]
        %v275 = vld [vmem:[#allocation5 + $0x140] sm:$0xff]
        %v276 = vld [vmem:[#allocation5 + $0x148] sm:$0xff]
        %v277 = vld [vmem:[#allocation5 + $0x150] sm:$0xff]
        %v278 = vld [vmem:[#allocation5 + $0x158] sm:$0xff]
        %v279 = vld [vmem:[#allocation5 + $0x160] sm:$0xff]
        %v280 = vld [vmem:[#allocation5 + $0x168] sm:$0xff]
        %v281 = vld [vmem:[#allocation5 + $0x170] sm:$0xff]
        %v282 = vld [vmem:[#allocation5 + $0x178] sm:$0xff]
        %v283 = vld [vmem:[%s2] sm:$0x1]
        %v285 = vlaneseq
        %v286 = vshrl.u32 %v285, 7
        %v287 = vsub.s32 0, %v286
        %v288 = vrot.slane %v283, %v287
        %290 = vmatprep.subr.mxu0 0.0
        %291 = vmatpush1.msra.mxu0 %v235
        %292 = vmatprep.subr.mxu0 0.0
        %293 = vmatpush1.msra.mxu0 %v236
        %294 = vmatprep.subr.mxu0 0.0
        %295 = vmatpush1.msra.mxu0 %v237
        %296 = vmatprep.subr.mxu0 0.0
        %297 = vmatpush1.msra.mxu0 %v238
        %298 = vmatprep.subr.mxu0 0.0
        %299 = vmatpush1.msra.mxu0 %v239
        %300 = vmatprep.subr.mxu0 0.0
        %301 = vmatpush1.msra.mxu0 %v240
        %302 = vmatprep.subr.mxu0 0.0
        %303 = vmatpush1.msra.mxu0 %v241
        %304 = vmatprep.subr.mxu0 0.0
        %305 = vmatpush1.msra.mxu0 %v242
        %306 = vmatprep.subr.mxu0 0.0
        %307 = vmatpush1.msra.mxu0 %v243
        %308 = vmatprep.subr.mxu0 0.0
        %309 = vmatpush1.msra.mxu0 %v244
        %310 = vmatprep.subr.mxu0 0.0
        %311 = vmatpush1.msra.mxu0 %v245
        %312 = vmatprep.subr.mxu0 0.0
        %313 = vmatpush1.msra.mxu0 %v246
        %314 = vmatprep.subr.mxu0 0.0
        %315 = vmatpush1.msra.mxu0 %v247
        %316 = vmatprep.subr.mxu0 0.0
        %317 = vmatpush1.msra.mxu0 %v248
        %318 = vmatprep.subr.mxu0 0.0
        %319 = vmatpush1.msra.mxu0 %v249
        %320 = vmatprep.subr.mxu0 0.0
        %321 = vmatpush1.msra.mxu0 %v250
        %322 = vmatprep.subr.mxu0 0.0
        %323 = vmatpush1.msra.mxu0 %v251
        %324 = vmatprep.subr.mxu0 0.0
        %325 = vmatpush1.msra.mxu0 %v252
        %326 = vmatprep.subr.mxu0 0.0
        %327 = vmatpush1.msra.mxu0 %v253
        %328 = vmatprep.subr.mxu0 0.0
        %329 = vmatpush1.msra.mxu0 %v254
        %330 = vmatprep.subr.mxu0 0.0
        %331 = vmatpush1.msra.mxu0 %v255
        %332 = vmatprep.subr.mxu0 0.0
        %333 = vmatpush1.msra.mxu0 %v256
        %334 = vmatprep.subr.mxu0 0.0
        %335 = vmatpush1.msra.mxu0 %v257
        %336 = vmatprep.subr.mxu0 0.0
        %337 = vmatpush1.msra.mxu0 %v258
        %338 = vmatprep.subr.mxu0 0.0
        %339 = vmatpush1.msra.mxu0 %v259
        %340 = vmatprep.subr.mxu0 0.0
        %341 = vmatpush1.msra.mxu0 %v260
        %342 = vmatprep.subr.mxu0 0.0
        %343 = vmatpush1.msra.mxu0 %v261
        %344 = vmatprep.subr.mxu0 0.0
        %345 = vmatpush1.msra.mxu0 %v262
        %346 = vmatprep.subr.mxu0 0.0
        %347 = vmatpush1.msra.mxu0 %v263
        %348 = vmatprep.subr.mxu0 0.0
        %349 = vmatpush1.msra.mxu0 %v264
        %350 = vmatprep.subr.mxu0 0.0
        %351 = vmatpush1.msra.mxu0 %v265
        %352 = vmatprep.subr.mxu0 0.0
        %353 = vmatpush1.msra.mxu0 %v266
        %354 = vmatprep.mubr.f32.mxu0 %v222
        %355 = vmatmul.mubr.f32.gmra.mrb[0].mxu0 %v215
        %v356 = vpop.f32.mrb[0].mxu0
        %v357 = vadd.f32 %v288, %v356
        %v358 = vpop.f32.mrb[0].mxu0
        %359 = vmatprep.mubr.f32.mxu0 %v224
        %360 = vmatmul.mubr.f32.gmra.mrb[0].mxu0 %v211
        %v361 = vpop.f32.mrb[0].mxu0
        %v362 = vadd.f32 %v288, %v361
        %v363 = vpop.f32.mrb[0].mxu0
        %364 = vdwg.mxu0
        %365 = vmatprep.subr.mxu0 0.0
        %366 = vmatpush1.msra.mxu0 %v267
        %367 = vmatprep.subr.mxu0 0.0
        %368 = vmatpush1.msra.mxu0 %v268
        %369 = vmatprep.subr.mxu0 0.0
        %370 = vmatpush1.msra.mxu0 %v269
        %371 = vmatprep.subr.mxu0 0.0
        %372 = vmatpush1.msra.mxu0 %v270
        %373 = vmatprep.subr.mxu0 0.0
        %374 = vmatpush1.msra.mxu0 %v271
        %375 = vmatprep.subr.mxu0 0.0
        %376 = vmatpush1.msra.mxu0 %v272
        %377 = vmatprep.subr.mxu0 0.0
        %378 = vmatpush1.msra.mxu0 %v273
        %379 = vmatprep.subr.mxu0 0.0
        %380 = vmatpush1.msra.mxu0 %v274
        %381 = vmatprep.subr.mxu0 0.0
        %382 = vmatpush1.msra.mxu0 %v275
        %383 = vmatprep.subr.mxu0 0.0
        %384 = vmatpush1.msra.mxu0 %v276
        %385 = vmatprep.subr.mxu0 0.0
        %386 = vmatpush1.msra.mxu0 %v277
        %387 = vmatprep.subr.mxu0 0.0
        %388 = vmatpush1.msra.mxu0 %v278
        %389 = vmatprep.subr.mxu0 0.0
        %390 = vmatpush1.msra.mxu0 %v279
        %391 = vmatprep.subr.mxu0 0.0
        %392 = vmatpush1.msra.mxu0 %v280
        %393 = vmatprep.subr.mxu0 0.0
        %394 = vmatpush1.msra.mxu0 %v281
        %395 = vmatprep.subr.mxu0 0.0
        %396 = vmatpush1.msra.mxu0 %v282
        %397 = vmatprep.subr.mxu0 0.0
        %398 = vmatpush1.msra.mxu0 0.0
        %399 = vmatprep.subr.mxu0 0.0
        %400 = vmatpush1.msra.mxu0 0.0
        %401 = vmatprep.subr.mxu0 0.0
        %402 = vmatpush1.msra.mxu0 0.0
        %403 = vmatprep.subr.mxu0 0.0
        %404 = vmatpush1.msra.mxu0 0.0
        %405 = vmatprep.subr.mxu0 0.0
        %406 = vmatpush1.msra.mxu0 0.0
        %407 = vmatprep.subr.mxu0 0.0
        %408 = vmatpush1.msra.mxu0 0.0
        %409 = vmatprep.subr.mxu0 0.0
        %410 = vmatpush1.msra.mxu0 0.0
        %411 = vmatprep.subr.mxu0 0.0
        %412 = vmatpush1.msra.mxu0 0.0
        %413 = vmatprep.subr.mxu0 0.0
        %414 = vmatpush1.msra.mxu0 0.0
        %415 = vmatprep.subr.mxu0 0.0
        %416 = vmatpush1.msra.mxu0 0.0
        %417 = vmatprep.subr.mxu0 0.0
        %418 = vmatpush1.msra.mxu0 0.0
        %419 = vmatprep.subr.mxu0 0.0
        %420 = vmatpush1.msra.mxu0 0.0
        %421 = vmatprep.subr.mxu0 0.0
        %422 = vmatpush1.msra.mxu0 0.0
        %423 = vmatprep.subr.mxu0 0.0
        %424 = vmatpush1.msra.mxu0 0.0
        %425 = vmatprep.subr.mxu0 0.0
        %426 = vmatpush1.msra.mxu0 0.0
        %427 = vmatprep.subr.mxu0 0.0
        %428 = vmatpush1.msra.mxu0 0.0
        %429 = vmatprep.mubr.f32.mxu0 0.0
        %430 = vmatmul.mubr.f32.gmra.mrb[0].mxu0 %v230
        %v431 = vpop.f32.mrb[0].mxu0
        %v432 = vadd.f32 %v357, %v431
        %v433 = vpop.f32.mrb[0].mxu0
        %434 = vmatprep.mubr.f32.mxu0 0.0
        %435 = vmatmul.mubr.f32.gmra.mrb[0].mxu0 %v232
        %v436 = vpop.f32.mrb[0].mxu0
        %v437 = vadd.f32 %v362, %v436
        %v438 = vpop.f32.mrb[0].mxu0
        %439 = vdwg.mxu0
        %v440 = vmul.f32 %v432, 0.5
        %v441 = vmul.f32 %v437, 0.5
        %v442 = vmul.f32 %v432, 0.70710677
        %v443 = vmul.f32 %v437, 0.70710677
        %v444 = verf.f32.pop %v442
        %v445 = verf.f32.pop %v443
        %v446 = vadd.f32 %v444, 1.0
        %v447 = vadd.f32 %v445, 1.0
        %v448 = vmul.f32 %v440, %v446
        %v449 = vmul.f32 %v441, %v447
        %v452 = vrot.slane %v448, 7
        %v453 = vrot.slane %v449, 7
        %v454 = vsel %vm208, %v452, %v453
        %v458 = vsel %vm208, 0.0, %v452
        %v459 = vsel %vm208, %v453, 0.0
        %v462 = vrot.slane %v458, 1
        %v463 = vrot.slane %v454, 1
        %v464 = vsel %vm219, %v462, %v463
        %v465 = vrot.slane %v459, 1
        %v466 = vsel %vm219, %v463, %v465
        %v469 = vrot.slane %v458, 2
        %v470 = vrot.slane %v454, 2
        %v471 = vsel %vm227, %v469, %v470
        %v472 = vrot.slane %v459, 2
        %v473 = vsel %vm227, %v470, %v472
        %s476 = scalar_lea.vmem [#allocation5], 384
        %v477 = vld [vmem:[%s476] sm:$0xff]
        %v478 = vld [vmem:[%s476 + $0x8] sm:$0xff]
        %v479 = vld [vmem:[%s476 + $0x10] sm:$0xff]
        %v480 = vld [vmem:[%s476 + $0x18] sm:$0xff]
        %v481 = vld [vmem:[%s476 + $0x20] sm:$0xff]
        %v482 = vld [vmem:[%s476 + $0x28] sm:$0xff]
        %v483 = vld [vmem:[%s476 + $0x30] sm:$0xff]
        %v484 = vld [vmem:[%s476 + $0x38] sm:$0xff]
        %v485 = vld [vmem:[%s476 + $0x40] sm:$0xff]
        %v486 = vld [vmem:[%s476 + $0x48] sm:$0xff]
        %v487 = vld [vmem:[%s476 + $0x50] sm:$0xff]
        %v488 = vld [vmem:[%s476 + $0x58] sm:$0xff]
        %v489 = vld [vmem:[%s476 + $0x60] sm:$0xff]
        %v490 = vld [vmem:[%s476 + $0x68] sm:$0xff]
        %v491 = vld [vmem:[%s476 + $0x70] sm:$0xff]
        %v492 = vld [vmem:[%s476 + $0x78] sm:$0xff]
        %v493 = vld [vmem:[%s476 + $0x80] sm:$0xff]
        %v494 = vld [vmem:[%s476 + $0x88] sm:$0xff]
        %v495 = vld [vmem:[%s476 + $0x90] sm:$0xff]
        %v496 = vld [vmem:[%s476 + $0x98] sm:$0xff]
        %v497 = vld [vmem:[%s476 + $0xa0] sm:$0xff]
        %v498 = vld [vmem:[%s476 + $0xa8] sm:$0xff]
        %v499 = vld [vmem:[%s476 + $0xb0] sm:$0xff]
        %v500 = vld [vmem:[%s476 + $0xb8] sm:$0xff]
        %v501 = vld [vmem:[%s476 + $0xc0] sm:$0xff]
        %v502 = vld [vmem:[%s476 + $0xc8] sm:$0xff]
        %v503 = vld [vmem:[%s476 + $0xd0] sm:$0xff]
        %v504 = vld [vmem:[%s476 + $0xd8] sm:$0xff]
        %v505 = vld [vmem:[%s476 + $0xe0] sm:$0xff]
        %v506 = vld [vmem:[%s476 + $0xe8] sm:$0xff]
        %v507 = vld [vmem:[%s476 + $0xf0] sm:$0xff]
        %v508 = vld [vmem:[%s476 + $0xf8] sm:$0xff]
        %v509 = vld [vmem:[%s476 + $0x100] sm:$0xff]
        %v510 = vld [vmem:[%s476 + $0x108] sm:$0xff]
        %v511 = vld [vmem:[%s476 + $0x110] sm:$0xff]
        %v512 = vld [vmem:[%s476 + $0x118] sm:$0xff]
        %v513 = vld [vmem:[%s476 + $0x120] sm:$0xff]
        %v514 = vld [vmem:[%s476 + $0x128] sm:$0xff]
        %v515 = vld [vmem:[%s476 + $0x130] sm:$0xff]
        %v516 = vld [vmem:[%s476 + $0x138] sm:$0xff]
        %v517 = vld [vmem:[%s476 + $0x140] sm:$0xff]
        %v518 = vld [vmem:[%s476 + $0x148] sm:$0xff]
        %v519 = vld [vmem:[%s476 + $0x150] sm:$0xff]
        %v520 = vld [vmem:[%s476 + $0x158] sm:$0xff]
        %v521 = vld [vmem:[%s476 + $0x160] sm:$0xff]
        %v522 = vld [vmem:[%s476 + $0x168] sm:$0xff]
        %v523 = vld [vmem:[%s476 + $0x170] sm:$0xff]
        %v524 = vld [vmem:[%s476 + $0x178] sm:$0xff]
        %s525 = scalar_lea.vmem %s2, 1
        %v526 = vld [vmem:[%s525] sm:$0x1]
        %v528 = vlaneseq
        %v529 = vshrl.u32 %v528, 7
        %v530 = vsub.s32 0, %v529
        %v531 = vrot.slane %v526, %v530
        %533 = vmatprep.subr.mxu0 0.0
        %534 = vmatpush1.msra.mxu0 %v477
        %535 = vmatprep.subr.mxu0 0.0
        %536 = vmatpush1.msra.mxu0 %v478
        %537 = vmatprep.subr.mxu0 0.0
        %538 = vmatpush1.msra.mxu0 %v479
        %539 = vmatprep.subr.mxu0 0.0
        %540 = vmatpush1.msra.mxu0 %v480
        %541 = vmatprep.subr.mxu0 0.0
        %542 = vmatpush1.msra.mxu0 %v481
        %543 = vmatprep.subr.mxu0 0.0
        %544 = vmatpush1.msra.mxu0 %v482
        %545 = vmatprep.subr.mxu0 0.0
        %546 = vmatpush1.msra.mxu0 %v483
        %547 = vmatprep.subr.mxu0 0.0
        %548 = vmatpush1.msra.mxu0 %v484
        %549 = vmatprep.subr.mxu0 0.0
        %550 = vmatpush1.msra.mxu0 %v485
        %551 = vmatprep.subr.mxu0 0.0
        %552 = vmatpush1.msra.mxu0 %v486
        %553 = vmatprep.subr.mxu0 0.0
        %554 = vmatpush1.msra.mxu0 %v487
        %555 = vmatprep.subr.mxu0 0.0
        %556 = vmatpush1.msra.mxu0 %v488
        %557 = vmatprep.subr.mxu0 0.0
        %558 = vmatpush1.msra.mxu0 %v489
        %559 = vmatprep.subr.mxu0 0.0
        %560 = vmatpush1.msra.mxu0 %v490
        %561 = vmatprep.subr.mxu0 0.0
        %562 = vmatpush1.msra.mxu0 %v491
        %563 = vmatprep.subr.mxu0 0.0
        %564 = vmatpush1.msra.mxu0 %v492
        %565 = vmatprep.subr.mxu0 0.0
        %566 = vmatpush1.msra.mxu0 %v493
        %567 = vmatprep.subr.mxu0 0.0
        %568 = vmatpush1.msra.mxu0 %v494
        %569 = vmatprep.subr.mxu0 0.0
        %570 = vmatpush1.msra.mxu0 %v495
        %571 = vmatprep.subr.mxu0 0.0
        %572 = vmatpush1.msra.mxu0 %v496
        %573 = vmatprep.subr.mxu0 0.0
        %574 = vmatpush1.msra.mxu0 %v497
        %575 = vmatprep.subr.mxu0 0.0
        %576 = vmatpush1.msra.mxu0 %v498
        %577 = vmatprep.subr.mxu0 0.0
        %578 = vmatpush1.msra.mxu0 %v499
        %579 = vmatprep.subr.mxu0 0.0
        %580 = vmatpush1.msra.mxu0 %v500
        %581 = vmatprep.subr.mxu0 0.0
        %582 = vmatpush1.msra.mxu0 %v501
        %583 = vmatprep.subr.mxu0 0.0
        %584 = vmatpush1.msra.mxu0 %v502
        %585 = vmatprep.subr.mxu0 0.0
        %586 = vmatpush1.msra.mxu0 %v503
        %587 = vmatprep.subr.mxu0 0.0
        %588 = vmatpush1.msra.mxu0 %v504
        %589 = vmatprep.subr.mxu0 0.0
        %590 = vmatpush1.msra.mxu0 %v505
        %591 = vmatprep.subr.mxu0 0.0
        %592 = vmatpush1.msra.mxu0 %v506
        %593 = vmatprep.subr.mxu0 0.0
        %594 = vmatpush1.msra.mxu0 %v507
        %595 = vmatprep.subr.mxu0 0.0
        %596 = vmatpush1.msra.mxu0 %v508
        %597 = vmatprep.mubr.f32.mxu0 %v464
        %598 = vmatmul.mubr.f32.gmra.mrb[0].mxu0 %v458
        %v599 = vpop.f32.mrb[0].mxu0
        %v600 = vadd.f32 %v531, %v599
        %v601 = vpop.f32.mrb[0].mxu0
        %602 = vmatprep.mubr.f32.mxu0 %v466
        %603 = vmatmul.mubr.f32.gmra.mrb[0].mxu0 %v454
        %v604 = vpop.f32.mrb[0].mxu0
        %v605 = vadd.f32 %v531, %v604
        %v606 = vpop.f32.mrb[0].mxu0
        %607 = vdwg.mxu0
        %608 = vmatprep.subr.mxu0 0.0
        %609 = vmatpush1.msra.mxu0 %v509
        %610 = vmatprep.subr.mxu0 0.0
        %611 = vmatpush1.msra.mxu0 %v510
        %612 = vmatprep.subr.mxu0 0.0
        %613 = vmatpush1.msra.mxu0 %v511
        %614 = vmatprep.subr.mxu0 0.0
        %615 = vmatpush1.msra.mxu0 %v512
        %616 = vmatprep.subr.mxu0 0.0
        %617 = vmatpush1.msra.mxu0 %v513
        %618 = vmatprep.subr.mxu0 0.0
        %619 = vmatpush1.msra.mxu0 %v514
        %620 = vmatprep.subr.mxu0 0.0
        %621 = vmatpush1.msra.mxu0 %v515
        %622 = vmatprep.subr.mxu0 0.0
        %623 = vmatpush1.msra.mxu0 %v516
        %624 = vmatprep.subr.mxu0 0.0
        %625 = vmatpush1.msra.mxu0 %v517
        %626 = vmatprep.subr.mxu0 0.0
        %627 = vmatpush1.msra.mxu0 %v518
        %628 = vmatprep.subr.mxu0 0.0
        %629 = vmatpush1.msra.mxu0 %v519
        %630 = vmatprep.subr.mxu0 0.0
        %631 = vmatpush1.msra.mxu0 %v520
        %632 = vmatprep.subr.mxu0 0.0
        %633 = vmatpush1.msra.mxu0 %v521
        %634 = vmatprep.subr.mxu0 0.0
        %635 = vmatpush1.msra.mxu0 %v522
        %636 = vmatprep.subr.mxu0 0.0
        %637 = vmatpush1.msra.mxu0 %v523
        %638 = vmatprep.subr.mxu0 0.0
        %639 = vmatpush1.msra.mxu0 %v524
        %640 = vmatprep.subr.mxu0 0.0
        %641 = vmatpush1.msra.mxu0 0.0
        %642 = vmatprep.subr.mxu0 0.0
        %643 = vmatpush1.msra.mxu0 0.0
        %644 = vmatprep.subr.mxu0 0.0
        %645 = vmatpush1.msra.mxu0 0.0
        %646 = vmatprep.subr.mxu0 0.0
        %647 = vmatpush1.msra.mxu0 0.0
        %648 = vmatprep.subr.mxu0 0.0
        %649 = vmatpush1.msra.mxu0 0.0
        %650 = vmatprep.subr.mxu0 0.0
        %651 = vmatpush1.msra.mxu0 0.0
        %652 = vmatprep.subr.mxu0 0.0
        %653 = vmatpush1.msra.mxu0 0.0
        %654 = vmatprep.subr.mxu0 0.0
        %655 = vmatpush1.msra.mxu0 0.0
        %656 = vmatprep.subr.mxu0 0.0
        %657 = vmatpush1.msra.mxu0 0.0
        %658 = vmatprep.subr.mxu0 0.0
        %659 = vmatpush1.msra.mxu0 0.0
        %660 = vmatprep.subr.mxu0 0.0
        %661 = vmatpush1.msra.mxu0 0.0
        %662 = vmatprep.subr.mxu0 0.0
        %663 = vmatpush1.msra.mxu0 0.0
        %664 = vmatprep.subr.mxu0 0.0
        %665 = vmatpush1.msra.mxu0 0.0
        %666 = vmatprep.subr.mxu0 0.0
        %667 = vmatpush1.msra.mxu0 0.0
        %668 = vmatprep.subr.mxu0 0.0
        %669 = vmatpush1.msra.mxu0 0.0
        %670 = vmatprep.subr.mxu0 0.0
        %671 = vmatpush1.msra.mxu0 0.0
        %672 = vmatprep.mubr.f32.mxu0 0.0
        %673 = vmatmul.mubr.f32.gmra.mrb[0].mxu0 %v471
        %v674 = vpop.f32.mrb[0].mxu0
        %v675 = vadd.f32 %v600, %v674
        %v676 = vpop.f32.mrb[0].mxu0
        %677 = vmatprep.mubr.f32.mxu0 0.0
        %678 = vmatmul.mubr.f32.gmra.mrb[0].mxu0 %v473
        %v679 = vpop.f32.mrb[0].mxu0
        %v680 = vadd.f32 %v605, %v679
        %v681 = vpop.f32.mrb[0].mxu0
        %682 = vdwg.mxu0
        %v683 = vadd.f32 %v204, %v675
        %v684 = vadd.f32 %v205, %v680
        %v685 = vmul.f32 %v683, 0.5
        %v686 = vmul.f32 %v684, 0.5
        %v687 = vmul.f32 %v683, 0.70710677
        %v688 = vmul.f32 %v684, 0.70710677
        %v689 = verf.f32.pop %v687
        %v690 = verf.f32.pop %v688
        %v691 = vadd.f32 %v689, 1.0
        %v692 = vadd.f32 %v690, 1.0
        %v693 = vmul.f32 %v685, %v691
        %v694 = vmul.f32 %v686, %v692
        %v697 = vrot.slane %v693, 7
        %v698 = vrot.slane %v694, 7
        %v699 = vsel %vm208, %v697, %v698
        %v703 = vsel %vm208, 0.0, %v697
        %v704 = vsel %vm208, %v698, 0.0
        %v707 = vrot.slane %v703, 1
        %v708 = vrot.slane %v699, 1
        %v709 = vsel %vm219, %v707, %v708
        %v710 = vrot.slane %v704, 1
        %v711 = vsel %vm219, %v708, %v710
        %v714 = vrot.slane %v703, 2
        %v715 = vrot.slane %v699, 2
        %v716 = vsel %vm227, %v714, %v715
        %v717 = vrot.slane %v704, 2
        %v718 = vsel %vm227, %v715, %v717
        %s721 = scalar_lea.vmem [#allocation5], 768
        %v722 = vld [vmem:[%s721] sm:$0xff]
        %v723 = vld [vmem:[%s721 + $0x8] sm:$0xff]
        %v724 = vld [vmem:[%s721 + $0x10] sm:$0xff]
        %v725 = vld [vmem:[%s721 + $0x18] sm:$0xff]
        %v726 = vld [vmem:[%s721 + $0x20] sm:$0xff]
        %v727 = vld [vmem:[%s721 + $0x28] sm:$0xff]
        %v728 = vld [vmem:[%s721 + $0x30] sm:$0xff]
        %v729 = vld [vmem:[%s721 + $0x38] sm:$0xff]
        %v730 = vld [vmem:[%s721 + $0x40] sm:$0xff]
        %v731 = vld [vmem:[%s721 + $0x48] sm:$0xff]
        %v732 = vld [vmem:[%s721 + $0x50] sm:$0xff]
        %v733 = vld [vmem:[%s721 + $0x58] sm:$0xff]
        %v734 = vld [vmem:[%s721 + $0x60] sm:$0xff]
        %v735 = vld [vmem:[%s721 + $0x68] sm:$0xff]
        %v736 = vld [vmem:[%s721 + $0x70] sm:$0xff]
        %v737 = vld [vmem:[%s721 + $0x78] sm:$0xff]
        %v738 = vld [vmem:[%s721 + $0x80] sm:$0xff]
        %v739 = vld [vmem:[%s721 + $0x88] sm:$0xff]
        %v740 = vld [vmem:[%s721 + $0x90] sm:$0xff]
        %v741 = vld [vmem:[%s721 + $0x98] sm:$0xff]
        %v742 = vld [vmem:[%s721 + $0xa0] sm:$0xff]
        %v743 = vld [vmem:[%s721 + $0xa8] sm:$0xff]
        %v744 = vld [vmem:[%s721 + $0xb0] sm:$0xff]
        %v745 = vld [vmem:[%s721 + $0xb8] sm:$0xff]
        %v746 = vld [vmem:[%s721 + $0xc0] sm:$0xff]
        %v747 = vld [vmem:[%s721 + $0xc8] sm:$0xff]
        %v748 = vld [vmem:[%s721 + $0xd0] sm:$0xff]
        %v749 = vld [vmem:[%s721 + $0xd8] sm:$0xff]
        %v750 = vld [vmem:[%s721 + $0xe0] sm:$0xff]
        %v751 = vld [vmem:[%s721 + $0xe8] sm:$0xff]
        %v752 = vld [vmem:[%s721 + $0xf0] sm:$0xff]
        %v753 = vld [vmem:[%s721 + $0xf8] sm:$0xff]
        %v754 = vld [vmem:[%s721 + $0x100] sm:$0xff]
        %v755 = vld [vmem:[%s721 + $0x108] sm:$0xff]
        %v756 = vld [vmem:[%s721 + $0x110] sm:$0xff]
        %v757 = vld [vmem:[%s721 + $0x118] sm:$0xff]
        %v758 = vld [vmem:[%s721 + $0x120] sm:$0xff]
        %v759 = vld [vmem:[%s721 + $0x128] sm:$0xff]
        %v760 = vld [vmem:[%s721 + $0x130] sm:$0xff]
        %v761 = vld [vmem:[%s721 + $0x138] sm:$0xff]
        %v762 = vld [vmem:[%s721 + $0x140] sm:$0xff]
        %v763 = vld [vmem:[%s721 + $0x148] sm:$0xff]
        %v764 = vld [vmem:[%s721 + $0x150] sm:$0xff]
        %v765 = vld [vmem:[%s721 + $0x158] sm:$0xff]
        %v766 = vld [vmem:[%s721 + $0x160] sm:$0xff]
        %v767 = vld [vmem:[%s721 + $0x168] sm:$0xff]
        %v768 = vld [vmem:[%s721 + $0x170] sm:$0xff]
        %v769 = vld [vmem:[%s721 + $0x178] sm:$0xff]
        %s770 = scalar_lea.vmem %s2, 2
        %v771 = vld [vmem:[%s770] sm:$0x1]
        %v773 = vlaneseq
        %v774 = vshrl.u32 %v773, 7
        %v775 = vsub.s32 0, %v774
        %v776 = vrot.slane %v771, %v775
        %778 = vmatprep.subr.mxu0 0.0
        %779 = vmatpush1.msra.mxu0 %v722
        %780 = vmatprep.subr.mxu0 0.0
        %781 = vmatpush1.msra.mxu0 %v723
        %782 = vmatprep.subr.mxu0 0.0
        %783 = vmatpush1.msra.mxu0 %v724
        %784 = vmatprep.subr.mxu0 0.0
        %785 = vmatpush1.msra.mxu0 %v725
        %786 = vmatprep.subr.mxu0 0.0
        %787 = vmatpush1.msra.mxu0 %v726
        %788 = vmatprep.subr.mxu0 0.0
        %789 = vmatpush1.msra.mxu0 %v727
        %790 = vmatprep.subr.mxu0 0.0
        %791 = vmatpush1.msra.mxu0 %v728
        %792 = vmatprep.subr.mxu0 0.0
        %793 = vmatpush1.msra.mxu0 %v729
        %794 = vmatprep.subr.mxu0 0.0
        %795 = vmatpush1.msra.mxu0 %v730
        %796 = vmatprep.subr.mxu0 0.0
        %797 = vmatpush1.msra.mxu0 %v731
        %798 = vmatprep.subr.mxu0 0.0
        %799 = vmatpush1.msra.mxu0 %v732
        %800 = vmatprep.subr.mxu0 0.0
        %801 = vmatpush1.msra.mxu0 %v733
        %802 = vmatprep.subr.mxu0 0.0
        %803 = vmatpush1.msra.mxu0 %v734
        %804 = vmatprep.subr.mxu0 0.0
        %805 = vmatpush1.msra.mxu0 %v735
        %806 = vmatprep.subr.mxu0 0.0
        %807 = vmatpush1.msra.mxu0 %v736
        %808 = vmatprep.subr.mxu0 0.0
        %809 = vmatpush1.msra.mxu0 %v737
        %810 = vmatprep.subr.mxu0 0.0
        %811 = vmatpush1.msra.mxu0 %v738
        %812 = vmatprep.subr.mxu0 0.0
        %813 = vmatpush1.msra.mxu0 %v739
        %814 = vmatprep.subr.mxu0 0.0
        %815 = vmatpush1.msra.mxu0 %v740
        %816 = vmatprep.subr.mxu0 0.0
        %817 = vmatpush1.msra.mxu0 %v741
        %818 = vmatprep.subr.mxu0 0.0
        %819 = vmatpush1.msra.mxu0 %v742
        %820 = vmatprep.subr.mxu0 0.0
        %821 = vmatpush1.msra.mxu0 %v743
        %822 = vmatprep.subr.mxu0 0.0
        %823 = vmatpush1.msra.mxu0 %v744
        %824 = vmatprep.subr.mxu0 0.0
        %825 = vmatpush1.msra.mxu0 %v745
        %826 = vmatprep.subr.mxu0 0.0
        %827 = vmatpush1.msra.mxu0 %v746
        %828 = vmatprep.subr.mxu0 0.0
        %829 = vmatpush1.msra.mxu0 %v747
        %830 = vmatprep.subr.mxu0 0.0
        %831 = vmatpush1.msra.mxu0 %v748
        %832 = vmatprep.subr.mxu0 0.0
        %833 = vmatpush1.msra.mxu0 %v749
        %834 = vmatprep.subr.mxu0 0.0
        %835 = vmatpush1.msra.mxu0 %v750
        %836 = vmatprep.subr.mxu0 0.0
        %837 = vmatpush1.msra.mxu0 %v751
        %838 = vmatprep.subr.mxu0 0.0
        %839 = vmatpush1.msra.mxu0 %v752
        %840 = vmatprep.subr.mxu0 0.0
        %841 = vmatpush1.msra.mxu0 %v753
        %842 = vmatprep.mubr.f32.mxu0 %v709
        %843 = vmatmul.mubr.f32.gmra.mrb[0].mxu0 %v703
        %v844 = vpop.f32.mrb[0].mxu0
        %v845 = vadd.f32 %v776, %v844
        %v846 = vpop.f32.mrb[0].mxu0
        %847 = vmatprep.mubr.f32.mxu0 %v711
        %848 = vmatmul.mubr.f32.gmra.mrb[0].mxu0 %v699
        %v849 = vpop.f32.mrb[0].mxu0
        %v850 = vadd.f32 %v776, %v849
        %v851 = vpop.f32.mrb[0].mxu0
        %852 = vdwg.mxu0
        %853 = vmatprep.subr.mxu0 0.0
        %854 = vmatpush1.msra.mxu0 %v754
        %855 = vmatprep.subr.mxu0 0.0
        %856 = vmatpush1.msra.mxu0 %v755
        %857 = vmatprep.subr.mxu0 0.0
        %858 = vmatpush1.msra.mxu0 %v756
        %859 = vmatprep.subr.mxu0 0.0
        %860 = vmatpush1.msra.mxu0 %v757
        %861 = vmatprep.subr.mxu0 0.0
        %862 = vmatpush1.msra.mxu0 %v758
        %863 = vmatprep.subr.mxu0 0.0
        %864 = vmatpush1.msra.mxu0 %v759
        %865 = vmatprep.subr.mxu0 0.0
        %866 = vmatpush1.msra.mxu0 %v760
        %867 = vmatprep.subr.mxu0 0.0
        %868 = vmatpush1.msra.mxu0 %v761
        %869 = vmatprep.subr.mxu0 0.0
        %870 = vmatpush1.msra.mxu0 %v762
        %871 = vmatprep.subr.mxu0 0.0
        %872 = vmatpush1.msra.mxu0 %v763
        %873 = vmatprep.subr.mxu0 0.0
        %874 = vmatpush1.msra.mxu0 %v764
        %875 = vmatprep.subr.mxu0 0.0
        %876 = vmatpush1.msra.mxu0 %v765
        %877 = vmatprep.subr.mxu0 0.0
        %878 = vmatpush1.msra.mxu0 %v766
        %879 = vmatprep.subr.mxu0 0.0
        %880 = vmatpush1.msra.mxu0 %v767
        %881 = vmatprep.subr.mxu0 0.0
        %882 = vmatpush1.msra.mxu0 %v768
        %883 = vmatprep.subr.mxu0 0.0
        %884 = vmatpush1.msra.mxu0 %v769
        %885 = vmatprep.subr.mxu0 0.0
        %886 = vmatpush1.msra.mxu0 0.0
        %887 = vmatprep.subr.mxu0 0.0
        %888 = vmatpush1.msra.mxu0 0.0
        %889 = vmatprep.subr.mxu0 0.0
        %890 = vmatpush1.msra.mxu0 0.0
        %891 = vmatprep.subr.mxu0 0.0
        %892 = vmatpush1.msra.mxu0 0.0
        %893 = vmatprep.subr.mxu0 0.0
        %894 = vmatpush1.msra.mxu0 0.0
        %895 = vmatprep.subr.mxu0 0.0
        %896 = vmatpush1.msra.mxu0 0.0
        %897 = vmatprep.subr.mxu0 0.0
        %898 = vmatpush1.msra.mxu0 0.0
        %899 = vmatprep.subr.mxu0 0.0
        %900 = vmatpush1.msra.mxu0 0.0
        %901 = vmatprep.subr.mxu0 0.0
        %902 = vmatpush1.msra.mxu0 0.0
        %903 = vmatprep.subr.mxu0 0.0
        %904 = vmatpush1.msra.mxu0 0.0
        %905 = vmatprep.subr.mxu0 0.0
        %906 = vmatpush1.msra.mxu0 0.0
        %907 = vmatprep.subr.mxu0 0.0
        %908 = vmatpush1.msra.mxu0 0.0
        %909 = vmatprep.subr.mxu0 0.0
        %910 = vmatpush1.msra.mxu0 0.0
        %911 = vmatprep.subr.mxu0 0.0
        %912 = vmatpush1.msra.mxu0 0.0
        %913 = vmatprep.subr.mxu0 0.0
        %914 = vmatpush1.msra.mxu0 0.0
        %915 = vmatprep.subr.mxu0 0.0
        %916 = vmatpush1.msra.mxu0 0.0
        %917 = vmatprep.mubr.f32.mxu0 0.0
        %918 = vmatmul.mubr.f32.gmra.mrb[0].mxu0 %v716
        %v919 = vpop.f32.mrb[0].mxu0
        %v920 = vadd.f32 %v845, %v919
        %v921 = vpop.f32.mrb[0].mxu0
        %922 = vmatprep.mubr.f32.mxu0 0.0
        %923 = vmatmul.mubr.f32.gmra.mrb[0].mxu0 %v718
        %v924 = vpop.f32.mrb[0].mxu0
        %v925 = vadd.f32 %v850, %v924
        %v926 = vpop.f32.mrb[0].mxu0
        %927 = vdwg.mxu0
        %v928 = vmul.f32 %v920, 0.5
        %v929 = vmul.f32 %v925, 0.5
        %v930 = vmul.f32 %v920, 0.70710677
        %v931 = vmul.f32 %v925, 0.70710677
        %v932 = verf.f32.pop %v930
        %v933 = verf.f32.pop %v931
        %v934 = vadd.f32 %v932, 1.0
        %v935 = vadd.f32 %v933, 1.0
        %v936 = vmul.f32 %v928, %v934
        %v937 = vmul.f32 %v929, %v935
        %v940 = vrot.slane %v936, 7
        %v941 = vrot.slane %v937, 7
        %v942 = vsel %vm208, %v940, %v941
        %v946 = vsel %vm208, 0.0, %v940
        %v947 = vsel %vm208, %v941, 0.0
        %v950 = vrot.slane %v946, 1
        %v951 = vrot.slane %v942, 1
        %v952 = vsel %vm219, %v950, %v951
        %v953 = vrot.slane %v947, 1
        %v954 = vsel %vm219, %v951, %v953
        %v957 = vrot.slane %v946, 2
        %v958 = vrot.slane %v942, 2
        %v959 = vsel %vm227, %v957, %v958
        %v960 = vrot.slane %v947, 2
        %v961 = vsel %vm227, %v958, %v960
        %s964 = scalar_lea.vmem [#allocation5], 1152
        %v965 = vld [vmem:[%s964] sm:$0xff]
        %v966 = vld [vmem:[%s964 + $0x8] sm:$0xff]
        %v967 = vld [vmem:[%s964 + $0x10] sm:$0xff]
        %v968 = vld [vmem:[%s964 + $0x18] sm:$0xff]
        %v969 = vld [vmem:[%s964 + $0x20] sm:$0xff]
        %v970 = vld [vmem:[%s964 + $0x28] sm:$0xff]
        %v971 = vld [vmem:[%s964 + $0x30] sm:$0xff]
        %v972 = vld [vmem:[%s964 + $0x38] sm:$0xff]
        %v973 = vld [vmem:[%s964 + $0x40] sm:$0xff]
        %v974 = vld [vmem:[%s964 + $0x48] sm:$0xff]
        %v975 = vld [vmem:[%s964 + $0x50] sm:$0xff]
        %v976 = vld [vmem:[%s964 + $0x58] sm:$0xff]
        %v977 = vld [vmem:[%s964 + $0x60] sm:$0xff]
        %v978 = vld [vmem:[%s964 + $0x68] sm:$0xff]
        %v979 = vld [vmem:[%s964 + $0x70] sm:$0xff]
        %v980 = vld [vmem:[%s964 + $0x78] sm:$0xff]
        %v981 = vld [vmem:[%s964 + $0x80] sm:$0xff]
        %v982 = vld [vmem:[%s964 + $0x88] sm:$0xff]
        %v983 = vld [vmem:[%s964 + $0x90] sm:$0xff]
        %v984 = vld [vmem:[%s964 + $0x98] sm:$0xff]
        %v985 = vld [vmem:[%s964 + $0xa0] sm:$0xff]
        %v986 = vld [vmem:[%s964 + $0xa8] sm:$0xff]
        %v987 = vld [vmem:[%s964 + $0xb0] sm:$0xff]
        %v988 = vld [vmem:[%s964 + $0xb8] sm:$0xff]
        %v989 = vld [vmem:[%s964 + $0xc0] sm:$0xff]
        %v990 = vld [vmem:[%s964 + $0xc8] sm:$0xff]
        %v991 = vld [vmem:[%s964 + $0xd0] sm:$0xff]
        %v992 = vld [vmem:[%s964 + $0xd8] sm:$0xff]
        %v993 = vld [vmem:[%s964 + $0xe0] sm:$0xff]
        %v994 = vld [vmem:[%s964 + $0xe8] sm:$0xff]
        %v995 = vld [vmem:[%s964 + $0xf0] sm:$0xff]
        %v996 = vld [vmem:[%s964 + $0xf8] sm:$0xff]
        %v997 = vld [vmem:[%s964 + $0x100] sm:$0xff]
        %v998 = vld [vmem:[%s964 + $0x108] sm:$0xff]
        %v999 = vld [vmem:[%s964 + $0x110] sm:$0xff]
        %v1000 = vld [vmem:[%s964 + $0x118] sm:$0xff]
        %v1001 = vld [vmem:[%s964 + $0x120] sm:$0xff]
        %v1002 = vld [vmem:[%s964 + $0x128] sm:$0xff]
        %v1003 = vld [vmem:[%s964 + $0x130] sm:$0xff]
        %v1004 = vld [vmem:[%s964 + $0x138] sm:$0xff]
        %v1005 = vld [vmem:[%s964 + $0x140] sm:$0xff]
        %v1006 = vld [vmem:[%s964 + $0x148] sm:$0xff]
        %v1007 = vld [vmem:[%s964 + $0x150] sm:$0xff]
        %v1008 = vld [vmem:[%s964 + $0x158] sm:$0xff]
        %v1009 = vld [vmem:[%s964 + $0x160] sm:$0xff]
        %v1010 = vld [vmem:[%s964 + $0x168] sm:$0xff]
        %v1011 = vld [vmem:[%s964 + $0x170] sm:$0xff]
        %v1012 = vld [vmem:[%s964 + $0x178] sm:$0xff]
        %s1013 = scalar_lea.vmem %s2, 3
        %v1014 = vld [vmem:[%s1013] sm:$0x1]
        %v1016 = vlaneseq
        %v1017 = vshrl.u32 %v1016, 7
        %v1018 = vsub.s32 0, %v1017
        %v1019 = vrot.slane %v1014, %v1018
        %1021 = vmatprep.subr.mxu0 0.0
        %1022 = vmatpush1.msra.mxu0 %v965
        %1023 = vmatprep.subr.mxu0 0.0
        %1024 = vmatpush1.msra.mxu0 %v966
        %1025 = vmatprep.subr.mxu0 0.0
        %1026 = vmatpush1.msra.mxu0 %v967
        %1027 = vmatprep.subr.mxu0 0.0
        %1028 = vmatpush1.msra.mxu0 %v968
        %1029 = vmatprep.subr.mxu0 0.0
        %1030 = vmatpush1.msra.mxu0 %v969
        %1031 = vmatprep.subr.mxu0 0.0
        %1032 = vmatpush1.msra.mxu0 %v970
        %1033 = vmatprep.subr.mxu0 0.0
        %1034 = vmatpush1.msra.mxu0 %v971
        %1035 = vmatprep.subr.mxu0 0.0
        %1036 = vmatpush1.msra.mxu0 %v972
        %1037 = vmatprep.subr.mxu0 0.0
        %1038 = vmatpush1.msra.mxu0 %v973
        %1039 = vmatprep.subr.mxu0 0.0
        %1040 = vmatpush1.msra.mxu0 %v974
        %1041 = vmatprep.subr.mxu0 0.0
        %1042 = vmatpush1.msra.mxu0 %v975
        %1043 = vmatprep.subr.mxu0 0.0
        %1044 = vmatpush1.msra.mxu0 %v976
        %1045 = vmatprep.subr.mxu0 0.0
        %1046 = vmatpush1.msra.mxu0 %v977
        %1047 = vmatprep.subr.mxu0 0.0
        %1048 = vmatpush1.msra.mxu0 %v978
        %1049 = vmatprep.subr.mxu0 0.0
        %1050 = vmatpush1.msra.mxu0 %v979
        %1051 = vmatprep.subr.mxu0 0.0
        %1052 = vmatpush1.msra.mxu0 %v980
        %1053 = vmatprep.subr.mxu0 0.0
        %1054 = vmatpush1.msra.mxu0 %v981
        %1055 = vmatprep.subr.mxu0 0.0
        %1056 = vmatpush1.msra.mxu0 %v982
        %1057 = vmatprep.subr.mxu0 0.0
        %1058 = vmatpush1.msra.mxu0 %v983
        %1059 = vmatprep.subr.mxu0 0.0
        %1060 = vmatpush1.msra.mxu0 %v984
        %1061 = vmatprep.subr.mxu0 0.0
        %1062 = vmatpush1.msra.mxu0 %v985
        %1063 = vmatprep.subr.mxu0 0.0
        %1064 = vmatpush1.msra.mxu0 %v986
        %1065 = vmatprep.subr.mxu0 0.0
        %1066 = vmatpush1.msra.mxu0 %v987
        %1067 = vmatprep.subr.mxu0 0.0
        %1068 = vmatpush1.msra.mxu0 %v988
        %1069 = vmatprep.subr.mxu0 0.0
        %1070 = vmatpush1.msra.mxu0 %v989
        %1071 = vmatprep.subr.mxu0 0.0
        %1072 = vmatpush1.msra.mxu0 %v990
        %1073 = vmatprep.subr.mxu0 0.0
        %1074 = vmatpush1.msra.mxu0 %v991
        %1075 = vmatprep.subr.mxu0 0.0
        %1076 = vmatpush1.msra.mxu0 %v992
        %1077 = vmatprep.subr.mxu0 0.0
        %1078 = vmatpush1.msra.mxu0 %v993
        %1079 = vmatprep.subr.mxu0 0.0
        %1080 = vmatpush1.msra.mxu0 %v994
        %1081 = vmatprep.subr.mxu0 0.0
        %1082 = vmatpush1.msra.mxu0 %v995
        %1083 = vmatprep.subr.mxu0 0.0
        %1084 = vmatpush1.msra.mxu0 %v996
        %1085 = vmatprep.mubr.f32.mxu0 %v952
        %1086 = vmatmul.mubr.f32.gmra.mrb[0].mxu0 %v946
        %v1087 = vpop.f32.mrb[0].mxu0
        %v1088 = vadd.f32 %v1019, %v1087
        %v1089 = vpop.f32.mrb[0].mxu0
        %1090 = vmatprep.mubr.f32.mxu0 %v954
        %1091 = vmatmul.mubr.f32.gmra.mrb[0].mxu0 %v942
        %v1092 = vpop.f32.mrb[0].mxu0
        %v1093 = vadd.f32 %v1019, %v1092
        %v1094 = vpop.f32.mrb[0].mxu0
        %1095 = vdwg.mxu0
        %1096 = vmatprep.subr.mxu0 0.0
        %1097 = vmatpush1.msra.mxu0 %v997
        %1098 = vmatprep.subr.mxu0 0.0
        %1099 = vmatpush1.msra.mxu0 %v998
        %1100 = vmatprep.subr.mxu0 0.0
        %1101 = vmatpush1.msra.mxu0 %v999
        %1102 = vmatprep.subr.mxu0 0.0
        %1103 = vmatpush1.msra.mxu0 %v1000
        %1104 = vmatprep.subr.mxu0 0.0
        %1105 = vmatpush1.msra.mxu0 %v1001
        %1106 = vmatprep.subr.mxu0 0.0
        %1107 = vmatpush1.msra.mxu0 %v1002
        %1108 = vmatprep.subr.mxu0 0.0
        %1109 = vmatpush1.msra.mxu0 %v1003
        %1110 = vmatprep.subr.mxu0 0.0
        %1111 = vmatpush1.msra.mxu0 %v1004
        %1112 = vmatprep.subr.mxu0 0.0
        %1113 = vmatpush1.msra.mxu0 %v1005
        %1114 = vmatprep.subr.mxu0 0.0
        %1115 = vmatpush1.msra.mxu0 %v1006
        %1116 = vmatprep.subr.mxu0 0.0
        %1117 = vmatpush1.msra.mxu0 %v1007
        %1118 = vmatprep.subr.mxu0 0.0
        %1119 = vmatpush1.msra.mxu0 %v1008
        %1120 = vmatprep.subr.mxu0 0.0
        %1121 = vmatpush1.msra.mxu0 %v1009
        %1122 = vmatprep.subr.mxu0 0.0
        %1123 = vmatpush1.msra.mxu0 %v1010
        %1124 = vmatprep.subr.mxu0 0.0
        %1125 = vmatpush1.msra.mxu0 %v1011
        %1126 = vmatprep.subr.mxu0 0.0
        %1127 = vmatpush1.msra.mxu0 %v1012
        %1128 = vmatprep.subr.mxu0 0.0
        %1129 = vmatpush1.msra.mxu0 0.0
        %1130 = vmatprep.subr.mxu0 0.0
        %1131 = vmatpush1.msra.mxu0 0.0
        %1132 = vmatprep.subr.mxu0 0.0
        %1133 = vmatpush1.msra.mxu0 0.0
        %1134 = vmatprep.subr.mxu0 0.0
        %1135 = vmatpush1.msra.mxu0 0.0
        %1136 = vmatprep.subr.mxu0 0.0
        %1137 = vmatpush1.msra.mxu0 0.0
        %1138 = vmatprep.subr.mxu0 0.0
        %1139 = vmatpush1.msra.mxu0 0.0
        %1140 = vmatprep.subr.mxu0 0.0
        %1141 = vmatpush1.msra.mxu0 0.0
        %1142 = vmatprep.subr.mxu0 0.0
        %1143 = vmatpush1.msra.mxu0 0.0
        %1144 = vmatprep.subr.mxu0 0.0
        %1145 = vmatpush1.msra.mxu0 0.0
        %1146 = vmatprep.subr.mxu0 0.0
        %1147 = vmatpush1.msra.mxu0 0.0
        %1148 = vmatprep.subr.mxu0 0.0
        %1149 = vmatpush1.msra.mxu0 0.0
        %1150 = vmatprep.subr.mxu0 0.0
        %1151 = vmatpush1.msra.mxu0 0.0
        %1152 = vmatprep.subr.mxu0 0.0
        %1153 = vmatpush1.msra.mxu0 0.0
        %1154 = vmatprep.subr.mxu0 0.0
        %1155 = vmatpush1.msra.mxu0 0.0
        %1156 = vmatprep.subr.mxu0 0.0
        %1157 = vmatpush1.msra.mxu0 0.0
        %1158 = vmatprep.subr.mxu0 0.0
        %1159 = vmatpush1.msra.mxu0 0.0
        %1160 = vmatprep.mubr.f32.mxu0 0.0
        %1161 = vmatmul.mubr.f32.gmra.mrb[0].mxu0 %v959
        %v1162 = vpop.f32.mrb[0].mxu0
        %v1163 = vadd.f32 %v1088, %v1162
        %v1164 = vpop.f32.mrb[0].mxu0
        %1165 = vmatprep.mubr.f32.mxu0 0.0
        %1166 = vmatmul.mubr.f32.gmra.mrb[0].mxu0 %v961
        %v1167 = vpop.f32.mrb[0].mxu0
        %v1168 = vadd.f32 %v1093, %v1167
        %v1169 = vpop.f32.mrb[0].mxu0
        %1170 = vdwg.mxu0
        %v1171 = vadd.f32 %v693, %v1163
        %v1172 = vadd.f32 %v694, %v1168
        %v1173 = vmul.f32 %v1171, 0.5
        %v1174 = vmul.f32 %v1172, 0.5
        %v1175 = vmul.f32 %v1171, 0.70710677
        %v1176 = vmul.f32 %v1172, 0.70710677
        %v1177 = verf.f32.pop %v1175
        %v1178 = verf.f32.pop %v1176
        %v1179 = vadd.f32 %v1177, 1.0
        %v1180 = vadd.f32 %v1178, 1.0
        %v1181 = vmul.f32 %v1173, %v1179
        %v1182 = vmul.f32 %v1174, %v1180
        %1183 = vst [vmem:[%s203] sm:$0xff] %v1181
        %1184 = vst [vmem:[%s203 + $0x8] sm:$0xff] %v1182
        %s1185 = sand.u32 %s97, 1
        %s1186 = scalar_lea.sflag [#allocation4], %s1185
        %s1187 = sand.u32 %s97, 1
        %s1188 = smul.addr %s1187, 16
        %s1189 = scalar_lea.vmem [#allocation7], %s1188
        // Predicated region
        $region41: #{tpu_custom_call.1} parent=31 // pred_check
          %p1190 = pneg %p107
        $region42: #{tpu_custom_call.1} parent=31 // pred_check_branch
          %1192 = sbr.rel (%p1190) target = $region44
        $region43: #{tpu_custom_call.1} parent=31 // pred_region
          %s1194 = ssub.s32 256, 256
          %1195 = vsyncadd %s1186, %s1194
          %s1196 = smul.addr %s21, 2
          %s1197 = smul.addr %s1196, 128
          %s1198 = scalar_lea.hbm %s3, %s1197
          %s1199 = sshll.u32 %s1189, 4
          %s1200 = int_to_ptr.vmem [resolvable:$true] %s1199
          %1205 = dma.vmem_to_hbm [thread:$0]  %s1200, 256, %s1198, %s1186, 128, 128, 8
        $region44: #{tpu_custom_call.1} parent=31 // pred_fallthru
          _
      $region32: #{tpu_custom_call.1} parent=5 // pred_fallthru
        _
      %p1206 = scmp.le.s32.totalorder 2, %s16
      // Predicated region
      $region45: #{tpu_custom_call.1} parent=5 // pred_check
        %p1207 = pneg %p1206
      $region46: #{tpu_custom_call.1} parent=5 // pred_check_branch
        %1209 = sbr.rel (%p1207) target = $region48
      $region47: #{tpu_custom_call.1} parent=5 // pred_region
        %s1210 = ssub.s32 %s16, 2
        // Predicated region
        $region49: #{tpu_custom_call.1} parent=47 // pred_check
          %p1211 = pneg %p113
        $region50: #{tpu_custom_call.1} parent=47 // pred_check_branch
          %1213 = sbr.rel (%p1211) target = $region52
        $region51: #{tpu_custom_call.1} parent=47 // pred_region
          %s1214 = sand.u32 %s98, 1
          %s1215 = scalar_lea.sflag [#allocation4], %s1214
          %s1216 = sand.u32 %s98, 1
          %s1217 = smul.addr %s1216, 16
          %s1218 = scalar_lea.vmem [#allocation7], %s1217
          %1219 = dma.done %s1215, 256
        $region52: #{tpu_custom_call.1} parent=47 // pred_fallthru
          _
      $region48: #{tpu_custom_call.1} parent=5 // pred_fallthru
        _
    $region6: #{tpu_custom_call.1} parent=1 // loop_footer
      %s20 = sadd.s32 1, %s16
    $region7: #{tpu_custom_call.1} parent=1 // loop_footer_branch
      %15 = sbr.rel target = $region3
    $region8: #{tpu_custom_call.1} parent=1 // loop_exit
      _
    %1220 = vsyncpa [#allocation3], 1
    %s1221 = scalar_lea.sflag [#allocation3], 1
    %1222 = vsyncpa %s1221, 1
    %1223 = vsyncpa [#allocation6], 1
    %1224 = vsyncpa [#allocation4], 1
    %s1225 = scalar_lea.sflag [#allocation4], 1
    %1226 = vsyncpa %s1225, 1

</llo_original>
